<compile_context>
chip_gen: v7x
topology: tpu7x:2x2x1
jax: 0.10.0
libtpu: 0.0.40
codegen_flags: <defaults>
</compile_context>

<pallas_src>
import jax
import jax.numpy as jnp
from jax.experimental import pallas as pl
from jax.experimental.pallas import tpu as pltpu


_VMEM_BUDGET_BYTES = 32 * 1024 * 1024  # safe scoped-VMEM target on v5e/v6e/v7x


def bahdanau_kernel(q_ref, k_ref, wa_ref, b_ref, ua_ref, va_ref, ctx_ref, w_ref):
    tb, S, H = k_ref.shape

    keys = k_ref[...]                                          # (tb, S, H) native dtype

    # Wa(query) + (ba + bu): one (tb, H) x (H, H) MXU matmul, f32 accumulate.
    wq = jnp.dot(q_ref[...], wa_ref[...],
                 preferred_element_type=jnp.float32) + b_ref[...]      # (tb, H) f32

    # Ua(keys): fold (tb, S) into the MXU M dim -> one (tb*S, H) x (H, H) matmul.
    # NOTE: keep tb*S a multiple of 8 so the reshape stays sublane-aligned.
    ua_k = jnp.dot(keys.reshape(tb * S, H), ua_ref[...],
                   preferred_element_type=jnp.float32).reshape(tb, S, H)

    h = jnp.tanh(wq[:, None, :] + ua_k)                        # (tb, S, H) f32

    # Va projection as VPU multiply + lane reduce (skip an N=1 MXU matmul).
    # Va bias dropped: a constant added to every score is softmax-invariant.
    scores = jnp.sum(h * va_ref[...].reshape(1, 1, H), axis=-1)        # (tb, S)

    # Numerically stable softmax over S, per batch row.
    m = jnp.max(scores, axis=-1, keepdims=True)                # (tb, 1)
    e = jnp.exp(scores - m)                                    # (tb, S)
    denom = jnp.sum(e, axis=-1, keepdims=True)                 # (tb, 1)
    w = e * pl.reciprocal(denom, approx=False)                 # (tb, S)

    # context[b] = sum_s w[b, s] * keys[b, s, :]  (VPU multiply + sublane reduce)
    ctx = jnp.sum(w[:, :, None] * keys.astype(jnp.float32), axis=1)    # (tb, H)

    ctx_ref[...] = ctx.astype(ctx_ref.dtype)                   # (tb, H) sublane-dense
    w_ref[...] = w.astype(w_ref.dtype)                         # (tb, S) sublane-dense


def _const_spec(shape):
    """BlockSpec for an operand whose index_map is constant across the grid.

    Single-buffered: it is never re-fetched, so the default double buffer only
    burns VMEM.  Falls back to the default pipeline mode if this JAX build
    lacks the knob.
    """
    index_map = lambda b: (0,) * len(shape)
    try:
        return pl.BlockSpec(shape, index_map, pipeline_mode=pl.Buffered(1))
    except (AttributeError, TypeError):
        return pl.BlockSpec(shape, index_map)


def _pick_batch_tile(B, S, H, key_itemsize):
    """Batch rows per grid step.

    * B <= 4: single grid step — overhead-bound, too small to split across
      v7x's two TensorCores anyway.
    * Larger B: target >= 4 grid steps (>= 2 per TC on v7x so the keys DMA can
      double-buffer on each core; on single-TC v5e/v6e it keeps tiles a few MiB
      while amortizing the ~0.35 us per-step overhead), capped by the VMEM
      budget: 2x keys tile (double buffer) + ~3 f32 temporaries of the same
      (tb, S, H) extent (ua_k, h, weighted keys).
    """
    if B <= 4:
        return B
    per_row_bytes = S * H * (2 * key_itemsize + 3 * 4)
    vmem_cap = max(1, (_VMEM_BUDGET_BYTES // 2) // per_row_bytes)
    tb = min(vmem_cap, pl.cdiv(B, 4))
    # Multiple of 8 rows: sublane-dense 2-D (tb, H)/(tb, S) blocks and the
    # (8, 128) BlockSpec divisibility rule on the second-to-last dim.
    tb = max(8, (tb // 8) * 8)
    return tb


def bahdanau_attention(query, keys, params, batch_tile=None):
    B, _, H = query.shape
    _, S, _ = keys.shape
    out_dtype = query.dtype

    tb = _pick_batch_tile(B, S, H, keys.dtype.itemsize) if batch_tile is None \
        else batch_tile

    # Pad the batch so the grid tiles evenly; padded rows produce a finite
    # uniform softmax and are sliced off below.
    grid_b = pl.cdiv(B, tb)
    B_pad = grid_b * tb
    q2d = query.reshape(B, H)
    keys_in = keys
    if B_pad != B:
        q2d = jnp.pad(q2d, ((0, B_pad - B), (0, 0)))
        keys_in = jnp.pad(keys, ((0, B_pad - B), (0, 0), (0, 0)))

    # Small parameter tensors.  Matmul weights in the keys dtype so bf16 keys
    # drive a bf16 x bf16 MXU matmul (f32 accumulate); bias / Va stay f32 since
    # they touch the post-accumulation f32 path.
    wa_t = params["wa_w"].T.astype(keys.dtype)                      # (H, H): q @ Wa^T
    ua_t = params["ua_w"].T.astype(keys.dtype)                      # (H, H): k @ Ua^T
    bias_row = (params["wa_b"] + params["ua_b"]).reshape(1, H).astype(jnp.float32)
    va_row = params["va_w"].reshape(1, H).astype(jnp.float32)

    # TODO(synk): on v6e/v7x with bf16 inputs, tanh/exp in bf16 would roughly
    # double EUP throughput; kept f32 here to preserve the 1e-5 f32 tolerance.
    ctx2d, w2d = pl.pallas_call(
        bahdanau_kernel,
        out_shape=(
            jax.ShapeDtypeStruct((B_pad, H), out_dtype),
            jax.ShapeDtypeStruct((B_pad, S), out_dtype),
        ),
        grid_spec=pltpu.PrefetchScalarGridSpec(
            num_scalar_prefetch=0,
            grid=(grid_b,),
            in_specs=[
                pl.BlockSpec((tb, H), lambda b: (b, 0)),        # query rows
                pl.BlockSpec((tb, S, H), lambda b: (b, 0, 0)),  # keys (native dtype)
                _const_spec((H, H)),                            # Wa^T
                _const_spec((1, H)),                            # ba + bu
                _const_spec((H, H)),                            # Ua^T
                _const_spec((1, H)),                            # Va row
            ],
            out_specs=[
                pl.BlockSpec((tb, H), lambda b: (b, 0)),        # context (2-D dense)
                pl.BlockSpec((tb, S), lambda b: (b, 0)),        # weights (2-D dense)
            ],
        ),
        compiler_params=pltpu.CompilerParams(
            dimension_semantics=("parallel",),
            vmem_limit_bytes=_VMEM_BUDGET_BYTES,
        ),
    )(q2d, keys_in, wa_t, bias_row, ua_t, va_row)

    context = ctx2d[:B].reshape(B, 1, H)
    weights = w2d[:B].reshape(B, 1, S)
    return context, weights


def _reference(query, keys, params):
    # Pure-JAX reference mirroring the PyTorch forward (including Va bias).
    wa = query @ params["wa_w"].T + params["wa_b"]
    ua = keys @ params["ua_w"].T + params["ua_b"]
    scores = jnp.tanh(wa + ua) @ params["va_w"].T + params["va_b"]   # (B, S, 1)
    scores = jnp.transpose(scores, (0, 2, 1))                        # (B, 1, S)
    weights = jax.nn.softmax(scores, axis=-1)
    context = jnp.einsum("bos,bsh->boh", weights, keys)
    return context, weights


if __name__ == "__main__":
    B, S, H = 2, 8, 32
    key = jax.random.PRNGKey(0)
    k_q, k_k, k1, k2, k3, k4, k5, k6 = jax.random.split(key, 8)

    query = jax.random.normal(k_q, (B, 1, H), dtype=jnp.float32)
    keys = jax.random.normal(k_k, (B, S, H), dtype=jnp.float32)

    # Deterministic parameter init (PyTorch nn.Linear shapes: W is (out, in)).
    scale = 1.0 / jnp.sqrt(H)
    params = {
        "wa_w": jax.random.uniform(k1, (H, H), jnp.float32, -scale, scale),
        "wa_b": jax.random.uniform(k2, (H,), jnp.float32, -scale, scale),
        "ua_w": jax.random.uniform(k3, (H, H), jnp.float32, -scale, scale),
        "ua_b": jax.random.uniform(k4, (H,), jnp.float32, -scale, scale),
        "va_w": jax.random.uniform(k5, (1, H), jnp.float32, -scale, scale),
        "va_b": jax.random.uniform(k6, (1,), jnp.float32, -scale, scale),
    }

    context, weights = bahdanau_attention(query, keys, params)
    context, weights = jax.block_until_ready((context, weights))

    ref_ctx, ref_w = _reference(query, keys, params)
    assert context.shape == (B, 1, H) and weights.shape == (B, 1, S)
    assert jnp.allclose(context, ref_ctx, atol=1e-5, rtol=1e-5)
    assert jnp.allclose(weights, ref_w, atol=1e-5, rtol=1e-5)

    print("KERNEL_OK")
</pallas_src>

<mosaic_0001>
module attributes {stable_mosaic.version = 11 : i64} {
  func.func @bahdanau_kernel(%arg0: i32, %arg1: memref<2x32xf32, #tpu.memory_space<vmem>>, %arg2: memref<2x8x32xf32, #tpu.memory_space<vmem>>, %arg3: memref<32x32xf32, #tpu.memory_space<vmem>>, %arg4: memref<1x32xf32, #tpu.memory_space<vmem>>, %arg5: memref<32x32xf32, #tpu.memory_space<vmem>>, %arg6: memref<1x32xf32, #tpu.memory_space<vmem>>, %arg7: memref<2x32xf32, #tpu.memory_space<vmem>>, %arg8: memref<2x8xf32, #tpu.memory_space<vmem>>) attributes {dimension_semantics = [#tpu.dimension_semantics<parallel>], iteration_bounds = array<i64: 1>, scalar_prefetch = 0 : i64, scratch_operands = 0 : i64, tpu.core_type = #tpu.core_type<tc>, window_params = [{transform_indices = @transform_0, window_bounds = array<i64: 2, 32>}, {transform_indices = @transform_1, window_bounds = array<i64: 2, 8, 32>}, {pipeline_mode = #tpu.pipeline_mode<synchronous>, transform_indices = @transform_2, window_bounds = array<i64: 32, 32>}, {pipeline_mode = #tpu.pipeline_mode<synchronous>, transform_indices = @transform_3, window_bounds = array<i64: 1, 32>}, {pipeline_mode = #tpu.pipeline_mode<synchronous>, transform_indices = @transform_4, window_bounds = array<i64: 32, 32>}, {pipeline_mode = #tpu.pipeline_mode<synchronous>, transform_indices = @transform_5, window_bounds = array<i64: 1, 32>}, {transform_indices = @transform_6, window_bounds = array<i64: 2, 32>}, {transform_indices = @transform_7, window_bounds = array<i64: 2, 8>}]} {
    %c0 = arith.constant 0 : index
    %c0_0 = arith.constant 0 : index
    %c0_1 = arith.constant 0 : index
    %0 = vector.load %arg2[%c0, %c0_0, %c0_1] : memref<2x8x32xf32, #tpu.memory_space<vmem>>, vector<2x8x32xf32>
    %c0_2 = arith.constant 0 : index
    %c0_3 = arith.constant 0 : index
    %1 = vector.load %arg1[%c0_2, %c0_3] : memref<2x32xf32, #tpu.memory_space<vmem>>, vector<2x32xf32>
    %c0_4 = arith.constant 0 : index
    %c0_5 = arith.constant 0 : index
    %2 = vector.load %arg3[%c0_4, %c0_5] : memref<32x32xf32, #tpu.memory_space<vmem>>, vector<32x32xf32>
    %cst = arith.constant dense<0.000000e+00> : vector<2x32xf32>
    %3 = tpu.matmul %1, %2, %cst {dimension_numbers = #tpu.dot_dimension_numbers<[1], [0], [0], [1], [0, 0, 1, 1], [], []>} : vector<2x32xf32>, vector<32x32xf32>, vector<2x32xf32> -> vector<2x32xf32>
    %c0_6 = arith.constant 0 : index
    %c0_7 = arith.constant 0 : index
    %4 = vector.load %arg4[%c0_6, %c0_7] : memref<1x32xf32, #tpu.memory_space<vmem>>, vector<1x32xf32>
    %5 = vector.broadcast %4 : vector<1x32xf32> to vector<2x32xf32>
    %6 = arith.addf %3, %5 : vector<2x32xf32>
    %7 = vector.shape_cast %0 : vector<2x8x32xf32> to vector<16x32xf32>
    %c0_8 = arith.constant 0 : index
    %c0_9 = arith.constant 0 : index
    %8 = vector.load %arg5[%c0_8, %c0_9] : memref<32x32xf32, #tpu.memory_space<vmem>>, vector<32x32xf32>
    %cst_10 = arith.constant dense<0.000000e+00> : vector<16x32xf32>
    %9 = tpu.matmul %7, %8, %cst_10 {dimension_numbers = #tpu.dot_dimension_numbers<[1], [0], [0], [1], [0, 0, 1, 1], [], []>} : vector<16x32xf32>, vector<32x32xf32>, vector<16x32xf32> -> vector<16x32xf32>
    %10 = vector.shape_cast %9 : vector<16x32xf32> to vector<2x8x32xf32>
    %11 = vector.shape_cast %6 : vector<2x32xf32> to vector<2x1x32xf32>
    %12 = vector.broadcast %11 : vector<2x1x32xf32> to vector<2x8x32xf32>
    %13 = arith.addf %12, %10 : vector<2x8x32xf32>
    %14 = math.tanh %13 : vector<2x8x32xf32>
    %c0_11 = arith.constant 0 : index
    %c0_12 = arith.constant 0 : index
    %15 = vector.load %arg6[%c0_11, %c0_12] : memref<1x32xf32, #tpu.memory_space<vmem>>, vector<1x32xf32>
    %16 = vector.shape_cast %15 : vector<1x32xf32> to vector<1x1x32xf32>
    %17 = vector.broadcast %16 : vector<1x1x32xf32> to vector<2x8x32xf32>
    %18 = arith.mulf %14, %17 : vector<2x8x32xf32>
    %cst_13 = arith.constant dense<0.000000e+00> : vector<2x8xf32>
    %19 = vector.multi_reduction <add>, %18, %cst_13 [2] : vector<2x8x32xf32> to vector<2x8xf32>
    %cst_14 = arith.constant dense<0xFF800000> : vector<2xf32>
    %20 = vector.multi_reduction <maximumf>, %19, %cst_14 [1] : vector<2x8xf32> to vector<2xf32>
    %21 = vector.shape_cast %20 : vector<2xf32> to vector<2x1xf32>
    %22 = vector.broadcast %21 : vector<2x1xf32> to vector<2x8xf32>
    %23 = arith.subf %19, %22 : vector<2x8xf32>
    %24 = math.exp %23 : vector<2x8xf32>
    %cst_15 = arith.constant dense<0.000000e+00> : vector<2xf32>
    %25 = vector.multi_reduction <add>, %24, %cst_15 [1] : vector<2x8xf32> to vector<2xf32>
    %26 = vector.shape_cast %25 : vector<2xf32> to vector<2x1xf32>
    %27 = tpu.reciprocal %26 : vector<2x1xf32> -> vector<2x1xf32>
    %28 = vector.broadcast %27 : vector<2x1xf32> to vector<2x8xf32>
    %29 = arith.mulf %24, %28 : vector<2x8xf32>
    %30 = vector.shape_cast %29 : vector<2x8xf32> to vector<2x8x1xf32>
    %31 = vector.broadcast %30 : vector<2x8x1xf32> to vector<2x8x32xf32>
    %32 = arith.mulf %31, %0 : vector<2x8x32xf32>
    %cst_16 = arith.constant dense<0.000000e+00> : vector<2x32xf32>
    %33 = vector.multi_reduction <add>, %32, %cst_16 [1] : vector<2x8x32xf32> to vector<2x32xf32>
    %c0_17 = arith.constant 0 : index
    %c0_18 = arith.constant 0 : index
    %34 = vector.load %arg7[%c0_17, %c0_18] : memref<2x32xf32, #tpu.memory_space<vmem>>, vector<2x32xf32>
    tpu.vector_store %arg7[%c0_17, %c0_18], %33 {strides = array<i32>} : memref<2x32xf32, #tpu.memory_space<vmem>>, vector<2x32xf32>,
    %c0_19 = arith.constant 0 : index
    %c0_20 = arith.constant 0 : index
    %35 = vector.load %arg8[%c0_19, %c0_20] : memref<2x8xf32, #tpu.memory_space<vmem>>, vector<2x8xf32>
    tpu.vector_store %arg8[%c0_19, %c0_20], %29 {strides = array<i32>} : memref<2x8xf32, #tpu.memory_space<vmem>>, vector<2x8xf32>,
    return
  }
  func.func @transform_0(%arg0: i32) -> (i32, i32) {
    %c0_i32 = arith.constant 0 : i32
    %c0_i32_0 = arith.constant 0 : i32
    return %arg0, %c0_i32 : i32, i32
  }
  func.func @transform_1(%arg0: i32) -> (i32, i32, i32) {
    %c0_i32 = arith.constant 0 : i32
    %c0_i32_0 = arith.constant 0 : i32
    %c0_i32_1 = arith.constant 0 : i32
    return %arg0, %c0_i32, %c0_i32_0 : i32, i32, i32
  }
  func.func @transform_2(%arg0: i32) -> (i32, i32) {
    %c0_i32 = arith.constant 0 : i32
    %c0_i32_0 = arith.constant 0 : i32
    %c0_i32_1 = arith.constant 0 : i32
    return %c0_i32, %c0_i32_0 : i32, i32
  }
  func.func @transform_3(%arg0: i32) -> (i32, i32) {
    %c0_i32 = arith.constant 0 : i32
    %c0_i32_0 = arith.constant 0 : i32
    %c0_i32_1 = arith.constant 0 : i32
    return %c0_i32, %c0_i32_0 : i32, i32
  }
  func.func @transform_4(%arg0: i32) -> (i32, i32) {
    %c0_i32 = arith.constant 0 : i32
    %c0_i32_0 = arith.constant 0 : i32
    %c0_i32_1 = arith.constant 0 : i32
    return %c0_i32, %c0_i32_0 : i32, i32
  }
  func.func @transform_5(%arg0: i32) -> (i32, i32) {
    %c0_i32 = arith.constant 0 : i32
    %c0_i32_0 = arith.constant 0 : i32
    %c0_i32_1 = arith.constant 0 : i32
    return %c0_i32, %c0_i32_0 : i32, i32
  }
  func.func @transform_6(%arg0: i32) -> (i32, i32) {
    %c0_i32 = arith.constant 0 : i32
    %c0_i32_0 = arith.constant 0 : i32
    return %arg0, %c0_i32 : i32, i32
  }
  func.func @transform_7(%arg0: i32) -> (i32, i32) {
    %c0_i32 = arith.constant 0 : i32
    %c0_i32_0 = arith.constant 0 : i32
    return %arg0, %c0_i32 : i32, i32
  }
}

</mosaic_0001>

<llo_original>
// kernel: tpu_custom_call.1
$region0: #{tpu_custom_call.1}
  #allocation0 [shape = 'u32[]', space=smem, size = 0x4, offset = 0x4, fixed_abs, tag = 'smem constant byte address 0x4 - core index']
  #allocation1 [shape = 'u32[144,128]{1,0:T(1,128)}', space=vmem, size = 0x12000, scoped, tag = 'internal scratch']
  %s0 = inlined_call_operand.hbm [shape: f32[2,32], index: 0, kind: input, shape index: {}]
  %s1 = inlined_call_operand.hbm [shape: f32[2,8,32], index: 1, kind: input, shape index: {}]
  %s2 = inlined_call_operand.hbm [shape: f32[32,32], index: 2, kind: input, shape index: {}]
  %s3 = inlined_call_operand.vmem [shape: f32[1,32], index: 3, kind: input, shape index: {}]
  %s4 = inlined_call_operand.hbm [shape: f32[32,32], index: 4, kind: input, shape index: {}]
  %s5 = inlined_call_operand.vmem [shape: f32[1,32], index: 5, kind: input, shape index: {}]
  %s6 = inlined_call_operand.hbm [shape: f32[2,32], index: 6, kind: output, shape index: {0}]
  %s7 = inlined_call_operand.hbm [shape: f32[2,8], index: 7, kind: output, shape index: {1}]
  %8 = xla_tuple %s6, %s7
  %s9 = sld [smem:[#allocation0]]
  $region58: #{tpu_custom_call.1} parent=0
    _
  %s11 = ssub.s32 1, %s9
  %s12 = scalar_select 0, %s11, %s9
  $region1: #{tpu_custom_call.1} parent=0
    #allocation2 [shape = 'u8[1024]{0}', space=vmem, size = 0x400, scoped, tag = 'input window, operand 0, single buffered']
    #allocation3 [shape = 's32[1]{0}', space=sflag, size = 0x4, scoped, tag = 'scoped memory for tpu_custom_call.1']
    #allocation4 [shape = 's32[1]{0}', space=sflag, size = 0x4, scoped, tag = 'scoped memory for tpu_custom_call.1']
    #allocation5 [shape = 'u8[8192]{0}', space=vmem, size = 0x2000, scoped, tag = 'input window, operand 1, single buffered']
    #allocation6 [shape = 's32[1]{0}', space=sflag, size = 0x4, scoped, tag = 'scoped memory for tpu_custom_call.1']
    #allocation7 [shape = 'u8[16384]{0}', space=vmem, size = 0x4000, scoped, tag = 'input window, operand 2, single buffered']
    #allocation8 [shape = 'u8[16384]{0}', space=vmem, size = 0x4000, scoped, tag = 'input window, operand 4, single buffered']
    #allocation9 [shape = 's32[1]{0}', space=sflag, size = 0x4, scoped, tag = 'scoped memory for tpu_custom_call.1']
    #allocation10 [shape = 'u8[1024]{0}', space=vmem, size = 0x400, scoped, tag = 'output window, operand 0, single buffered']
    #allocation11 [shape = 'u8[1024]{0}', space=vmem, size = 0x400, scoped, tag = 'output window, operand 1, single buffered']
    #allocation12 [shape = 's32[1]{0}', space=sflag, size = 0x4, scoped, tag = 'scoped memory for tpu_custom_call.1']
    %13 = vsyncpa [#allocation3], 0
    %14 = vsyncpa [#allocation6], 0
    %15 = vsyncpa [#allocation9], 0
    %16 = vsyncpa [#allocation4], 0
    %17 = vsyncpa [#allocation12], 0
    // Predicated region
    $region2: #{tpu_custom_call.1} parent=1 // pred_check
      _
    $region3: #{tpu_custom_call.1} parent=1 // pred_check_branch
      %19 = sbr.rel (0) target = $region5
    $region4: #{tpu_custom_call.1} parent=1 // pred_region
      %s21 = ssub.s32 32, 32
      %22 = vsyncadd [#allocation3], %s21
      %s24 = sshll.u32 [#allocation2], 4
      %s25 = int_to_ptr.vmem [resolvable:$true] %s24
      %27 = dma.hbm_to_vmem [thread:$0]  %s0, 32, %s25, [#allocation3]
    $region5: #{tpu_custom_call.1} parent=1 // pred_fallthru
      _
    // Predicated region
    $region6: #{tpu_custom_call.1} parent=1 // pred_check
      _
    $region7: #{tpu_custom_call.1} parent=1 // pred_check_branch
      %29 = sbr.rel (0) target = $region9
    $region8: #{tpu_custom_call.1} parent=1 // pred_region
      %s31 = ssub.s32 256, 256
      %32 = vsyncadd [#allocation6], %s31
      %s33 = sshll.u32 [#allocation5], 4
      %s34 = int_to_ptr.vmem [resolvable:$true] %s33
      %39 = dma.hbm_to_vmem [thread:$0]  %s1, 256, %s34, [#allocation6], 128, 128, 8
    $region9: #{tpu_custom_call.1} parent=1 // pred_fallthru
      _
    // Predicated region
    $region10: #{tpu_custom_call.1} parent=1 // pred_check
      _
    $region11: #{tpu_custom_call.1} parent=1 // pred_check_branch
      %41 = sbr.rel (0) target = $region13
    $region12: #{tpu_custom_call.1} parent=1 // pred_region
      %s43 = ssub.s32 512, 512
      %44 = vsyncadd [#allocation6], %s43
      %s45 = sshll.u32 [#allocation7], 4
      %s46 = int_to_ptr.vmem [resolvable:$true] %s45
      %51 = dma.hbm_to_vmem [thread:$0]  %s2, 512, %s46, [#allocation6], 128, 128, 8
    $region13: #{tpu_custom_call.1} parent=1 // pred_fallthru
      _
    // Predicated region
    $region14: #{tpu_custom_call.1} parent=1 // pred_check
      _
    $region15: #{tpu_custom_call.1} parent=1 // pred_check_branch
      %53 = sbr.rel (0) target = $region17
    $region16: #{tpu_custom_call.1} parent=1 // pred_region
      _
    $region17: #{tpu_custom_call.1} parent=1 // pred_fallthru
      _
    // Predicated region
    $region18: #{tpu_custom_call.1} parent=1 // pred_check
      _
    $region19: #{tpu_custom_call.1} parent=1 // pred_check_branch
      %55 = sbr.rel (0) target = $region21
    $region20: #{tpu_custom_call.1} parent=1 // pred_region
      %s57 = ssub.s32 512, 512
      %58 = vsyncadd [#allocation9], %s57
      %s59 = sshll.u32 [#allocation8], 4
      %s60 = int_to_ptr.vmem [resolvable:$true] %s59
      %65 = dma.hbm_to_vmem [thread:$0]  %s4, 512, %s60, [#allocation9], 128, 128, 8
    $region21: #{tpu_custom_call.1} parent=1 // pred_fallthru
      _
    // Predicated region
    $region22: #{tpu_custom_call.1} parent=1 // pred_check
      _
    $region23: #{tpu_custom_call.1} parent=1 // pred_check_branch
      %67 = sbr.rel (0) target = $region25
    $region24: #{tpu_custom_call.1} parent=1 // pred_region
      _
    $region25: #{tpu_custom_call.1} parent=1 // pred_fallthru
      _
    // Predicated region
    $region26: #{tpu_custom_call.1} parent=1 // pred_check
      _
    $region27: #{tpu_custom_call.1} parent=1 // pred_check_branch
      %69 = sbr.rel (0) target = $region29
    $region28: #{tpu_custom_call.1} parent=1 // pred_region
      %70 = dma.done [#allocation3], 32
    $region29: #{tpu_custom_call.1} parent=1 // pred_fallthru
      _
    // Predicated region
    $region30: #{tpu_custom_call.1} parent=1 // pred_check
      _
    $region31: #{tpu_custom_call.1} parent=1 // pred_check_branch
      %72 = sbr.rel (0) target = $region33
    $region32: #{tpu_custom_call.1} parent=1 // pred_region
      %73 = dma.done [#allocation6], 256
    $region33: #{tpu_custom_call.1} parent=1 // pred_fallthru
      _
    // Predicated region
    $region34: #{tpu_custom_call.1} parent=1 // pred_check
      _
    $region35: #{tpu_custom_call.1} parent=1 // pred_check_branch
      %75 = sbr.rel (0) target = $region37
    $region36: #{tpu_custom_call.1} parent=1 // pred_region
      %76 = dma.done [#allocation6], 512
    $region37: #{tpu_custom_call.1} parent=1 // pred_fallthru
      _
    // Predicated region
    $region38: #{tpu_custom_call.1} parent=1 // pred_check
      _
    $region39: #{tpu_custom_call.1} parent=1 // pred_check_branch
      %78 = sbr.rel (0) target = $region41
    $region40: #{tpu_custom_call.1} parent=1 // pred_region
      %79 = dma.done [#allocation9], 512
    $region41: #{tpu_custom_call.1} parent=1 // pred_fallthru
      _
    %v80 = vld [vmem:[#allocation5] sm:$0xff]
    %v81 = vld [vmem:[#allocation5 + $0x8] sm:$0xff]
    %v82 = vld [vmem:[#allocation2] sm:$0x3]
    %v83 = vld [vmem:[#allocation7] sm:$0xff]
    %v84 = vld [vmem:[#allocation7 + $0x8] sm:$0xff]
    %v85 = vld [vmem:[#allocation7 + $0x10] sm:$0xff]
    %v86 = vld [vmem:[#allocation7 + $0x18] sm:$0xff]
    %v87 = vld [vmem:[%s3] sm:$0x1]
    %v89 = vlaneseq
    %v90 = vshrl.u32 %v89, 7
    %v91 = vsub.s32 0, %v90
    %v92 = vrot.slane %v87, %v91
    %vm94 = vcmask 261120
    %v96 = vsel %vm94, %v82, 0
    %98 = vmatprep.subr.mxu0 0.0
    %99 = vmatpush1.msra.mxu0 %v83
    %100 = vmatprep.subr.mxu0 0.0
    %101 = vmatpush1.msra.mxu0 %v84
    %102 = vmatprep.subr.mxu0 0.0
    %103 = vmatpush1.msra.mxu0 %v85
    %104 = vmatprep.subr.mxu0 0.0
    %105 = vmatpush1.msra.mxu0 %v86
    %106 = vmatprep.subr.mxu0 0.0
    %107 = vmatpush1.msra.mxu0 0.0
    %108 = vmatprep.subr.mxu0 0.0
    %109 = vmatpush1.msra.mxu0 0.0
    %110 = vmatprep.subr.mxu0 0.0
    %111 = vmatpush1.msra.mxu0 0.0
    %112 = vmatprep.subr.mxu0 0.0
    %113 = vmatpush1.msra.mxu0 0.0
    %114 = vmatprep.subr.mxu0 0.0
    %115 = vmatpush1.msra.mxu0 0.0
    %116 = vmatprep.subr.mxu0 0.0
    %117 = vmatpush1.msra.mxu0 0.0
    %118 = vmatprep.subr.mxu0 0.0
    %119 = vmatpush1.msra.mxu0 0.0
    %120 = vmatprep.subr.mxu0 0.0
    %121 = vmatpush1.msra.mxu0 0.0
    %122 = vmatprep.subr.mxu0 0.0
    %123 = vmatpush1.msra.mxu0 0.0
    %124 = vmatprep.subr.mxu0 0.0
    %125 = vmatpush1.msra.mxu0 0.0
    %126 = vmatprep.subr.mxu0 0.0
    %127 = vmatpush1.msra.mxu0 0.0
    %128 = vmatprep.subr.mxu0 0.0
    %129 = vmatpush1.msra.mxu0 0.0
    %130 = vmatprep.subr.mxu0 0.0
    %131 = vmatpush1.msra.mxu0 0.0
    %132 = vmatprep.subr.mxu0 0.0
    %133 = vmatpush1.msra.mxu0 0.0
    %134 = vmatprep.subr.mxu0 0.0
    %135 = vmatpush1.msra.mxu0 0.0
    %136 = vmatprep.subr.mxu0 0.0
    %137 = vmatpush1.msra.mxu0 0.0
    %138 = vmatprep.subr.mxu0 0.0
    %139 = vmatpush1.msra.mxu0 0.0
    %140 = vmatprep.subr.mxu0 0.0
    %141 = vmatpush1.msra.mxu0 0.0
    %142 = vmatprep.subr.mxu0 0.0
    %143 = vmatpush1.msra.mxu0 0.0
    %144 = vmatprep.subr.mxu0 0.0
    %145 = vmatpush1.msra.mxu0 0.0
    %146 = vmatprep.subr.mxu0 0.0
    %147 = vmatpush1.msra.mxu0 0.0
    %148 = vmatprep.subr.mxu0 0.0
    %149 = vmatpush1.msra.mxu0 0.0
    %150 = vmatprep.subr.mxu0 0.0
    %151 = vmatpush1.msra.mxu0 0.0
    %152 = vmatprep.subr.mxu0 0.0
    %153 = vmatpush1.msra.mxu0 0.0
    %154 = vmatprep.subr.mxu0 0.0
    %155 = vmatpush1.msra.mxu0 0.0
    %156 = vmatprep.subr.mxu0 0.0
    %157 = vmatpush1.msra.mxu0 0.0
    %158 = vmatprep.subr.mxu0 0.0
    %159 = vmatpush1.msra.mxu0 0.0
    %160 = vmatprep.subr.mxu0 0.0
    %161 = vmatpush1.msra.mxu0 0.0
    %162 = vmatprep.mubr.f32.mxu0 0.0
    %163 = vmatmul.mubr.f32.gmra.mrb[0].mxu0 %v96
    %v164 = vpop.f32.mrb[0].mxu0
    %v165 = vadd.f32 %v92, %v164
    %v166 = vpop.f32.mrb[0].mxu0
    %167 = vdwg.mxu0
    %v168 = vld [vmem:[#allocation8] sm:$0xff]
    %v169 = vld [vmem:[#allocation8 + $0x8] sm:$0xff]
    %v170 = vld [vmem:[#allocation8 + $0x10] sm:$0xff]
    %v171 = vld [vmem:[#allocation8 + $0x18] sm:$0xff]
    %v173 = vsel %vm94, %v80, 0
    %v176 = vsel %vm94, %v81, 0
    %178 = vmatprep.subr.mxu0 0.0
    %179 = vmatpush1.msra.mxu0 %v168
    %180 = vmatprep.subr.mxu0 0.0
    %181 = vmatpush1.msra.mxu0 %v169
    %182 = vmatprep.subr.mxu0 0.0
    %183 = vmatpush1.msra.mxu0 %v170
    %184 = vmatprep.subr.mxu0 0.0
    %185 = vmatpush1.msra.mxu0 %v171
    %186 = vmatprep.subr.mxu0 0.0
    %187 = vmatpush1.msra.mxu0 0.0
    %188 = vmatprep.subr.mxu0 0.0
    %189 = vmatpush1.msra.mxu0 0.0
    %190 = vmatprep.subr.mxu0 0.0
    %191 = vmatpush1.msra.mxu0 0.0
    %192 = vmatprep.subr.mxu0 0.0
    %193 = vmatpush1.msra.mxu0 0.0
    %194 = vmatprep.subr.mxu0 0.0
    %195 = vmatpush1.msra.mxu0 0.0
    %196 = vmatprep.subr.mxu0 0.0
    %197 = vmatpush1.msra.mxu0 0.0
    %198 = vmatprep.subr.mxu0 0.0
    %199 = vmatpush1.msra.mxu0 0.0
    %200 = vmatprep.subr.mxu0 0.0
    %201 = vmatpush1.msra.mxu0 0.0
    %202 = vmatprep.subr.mxu0 0.0
    %203 = vmatpush1.msra.mxu0 0.0
    %204 = vmatprep.subr.mxu0 0.0
    %205 = vmatpush1.msra.mxu0 0.0
    %206 = vmatprep.subr.mxu0 0.0
    %207 = vmatpush1.msra.mxu0 0.0
    %208 = vmatprep.subr.mxu0 0.0
    %209 = vmatpush1.msra.mxu0 0.0
    %210 = vmatprep.subr.mxu0 0.0
    %211 = vmatpush1.msra.mxu0 0.0
    %212 = vmatprep.subr.mxu0 0.0
    %213 = vmatpush1.msra.mxu0 0.0
    %214 = vmatprep.subr.mxu0 0.0
    %215 = vmatpush1.msra.mxu0 0.0
    %216 = vmatprep.subr.mxu0 0.0
    %217 = vmatpush1.msra.mxu0 0.0
    %218 = vmatprep.subr.mxu0 0.0
    %219 = vmatpush1.msra.mxu0 0.0
    %220 = vmatprep.subr.mxu0 0.0
    %221 = vmatpush1.msra.mxu0 0.0
    %222 = vmatprep.subr.mxu0 0.0
    %223 = vmatpush1.msra.mxu0 0.0
    %224 = vmatprep.subr.mxu0 0.0
    %225 = vmatpush1.msra.mxu0 0.0
    %226 = vmatprep.subr.mxu0 0.0
    %227 = vmatpush1.msra.mxu0 0.0
    %228 = vmatprep.subr.mxu0 0.0
    %229 = vmatpush1.msra.mxu0 0.0
    %230 = vmatprep.subr.mxu0 0.0
    %231 = vmatpush1.msra.mxu0 0.0
    %232 = vmatprep.subr.mxu0 0.0
    %233 = vmatpush1.msra.mxu0 0.0
    %234 = vmatprep.subr.mxu0 0.0
    %235 = vmatpush1.msra.mxu0 0.0
    %236 = vmatprep.subr.mxu0 0.0
    %237 = vmatpush1.msra.mxu0 0.0
    %238 = vmatprep.subr.mxu0 0.0
    %239 = vmatpush1.msra.mxu0 0.0
    %240 = vmatprep.subr.mxu0 0.0
    %241 = vmatpush1.msra.mxu0 0.0
    %242 = vmatprep.mubr.f32.mxu0 0.0
    %243 = vmatmul.mubr.f32.gmra.mrb[0].mxu0 %v173
    %v244 = vpop.f32.mrb[0].mxu0
    %v245 = vadd.f32 0.0, %v244
    %v246 = vpop.f32.mrb[0].mxu0
    %247 = vmatprep.mubr.f32.mxu0 0.0
    %248 = vmatmul.mubr.f32.gmra.mrb[0].mxu0 %v176
    %v249 = vpop.f32.mrb[0].mxu0
    %v250 = vadd.f32 0.0, %v249
    %v251 = vpop.f32.mrb[0].mxu0
    %252 = vdwg.mxu0
    %v255 = vunpack.c.l.s4 1966171168
    %v256 = vunpack.c.0.s8 %v255
    %v257 = vlaneseq
    %v258 = vshrl.u32 %v257, 7
    %v259 = vsub.s32 %v256, %v258
    %v260 = vrot.slane %v165, %v259
    %v261 = vcombine.high %v260, %v260
    %v263 = vunpack.c.l.s4 1966171168
    %v264 = vunpack.c.0.s8 %v263
    %v265 = vlaneseq
    %v266 = vshrl.u32 %v265, 7
    %v267 = vsub.s32 %v264, %v266
    %v268 = vrot.slane %v260, %v267
    %v270 = vunpack.c.l.s4 1966171168
    %v271 = vunpack.c.0.s8 %v270
    %v272 = vlaneseq
    %v273 = vshrl.u32 %v272, 7
    %v274 = vsub.s32 %v271, %v273
    %v275 = vrot.slane %v261, %v274
    %v276 = vlaneseq
    %v277 = vshrl.u32 %v276, 7
    %v278 = vsub.s32 0, %v277
    %v279 = vrot.slane %v268, %v278
    %v280 = vlaneseq
    %v281 = vshrl.u32 %v280, 7
    %v282 = vsub.s32 0, %v281
    %v283 = vrot.slane %v275, %v282
    %v286 = vadd.f32 %v279, %v245
    %v287 = vadd.f32 %v283, %v250
    %v288 = vtanh.pop %v286
    %v289 = vtanh.pop %v287
    %v290 = vld [vmem:[%s5] sm:$0x1]
    %v292 = vlaneseq
    %v293 = vshrl.u32 %v292, 7
    %v294 = vsub.s32 0, %v293
    %v295 = vrot.slane %v290, %v294
    %v297 = vmul.f32 %v288, %v295
    %v298 = vmul.f32 %v289, %v295
    %v299 = vsel %vm94, %v297, 0.0
    %300 = vadd.xlane.f32.xlu0 %v299
    %v301 = vpop.xlane.xlu0 %300
    %v302 = vsel %vm94, %v298, 0.0
    %303 = vadd.xlane.f32.xlu0 %v302
    %v304 = vpop.xlane.xlu0 %303
    %v307 = vlaneseq
    %v308 = vand.u32 %v307, 127
    %v309 = vlaneseq
    %v310 = vshrl.u32 %v309, 7
    %v311 = vsub.s32 %v308, %v310
    %v312 = vrot.slane %v301, %v311
    %v313 = vlaneseq
    %v314 = vshrl.u32 %v313, 7
    %v315 = vsub.s32 %v308, %v314
    %v316 = vrot.slane %v304, %v315
    %vm317 = vcmask 1041409
    %v318 = vsel %vm317, %v316, %v312
    %vm320 = vcmask 58368
    %v321 = vsel %vm320, %v318, -inf
    %322 = vmax.xlane.f32.xlu0 %v321
    %v323 = vpop.xlane.xlu0 %322
    %v325 = vlaneseq
    %v326 = vshrl.u32 %v325, 7
    %v327 = vsub.s32 0, %v326
    %v328 = vrot.slane %v323, %v327
    %v329 = vlaneseq
    %v330 = vshrl.u32 %v329, 7
    %v331 = vsub.s32 1, %v330
    %v332 = vrot.slane %v323, %v331
    %v335 = vsub.f32 %v301, %v328
    %v336 = vsub.f32 %v304, %v332
    %v337 = vmul.f32 %v335, 1.442695
    %v338 = vpow.pop %v337
    %v339 = vmul.f32 %v336, 1.442695
    %v340 = vpow.pop %v339
    %343 = vset.pattern.permute.xlu0 0
    %344 = vperm.xlu0 %343, %v338
    %v345 = vpop.permute.xlu0 %344
    %346 = vset.pattern.permute.xlu0 0
    %347 = vperm.xlu0 %346, %v340
    %v348 = vpop.permute.xlu0 %347
    %v349 = vlaneseq
    %v350 = vshrl.u32 %v349, 7
    %v351 = vsub.s32 %v308, %v350
    %v352 = vrot.slane %v345, %v351
    %v353 = vlaneseq
    %v354 = vshrl.u32 %v353, 7
    %v355 = vsub.s32 %v308, %v354
    %v356 = vrot.slane %v348, %v355
    %v357 = vsel %vm317, %v356, %v352
    %v359 = vsel %vm320, %v357, 0.0
    %360 = vadd.xlane.f32.xlu0 %v359
    %v361 = vpop.xlane.xlu0 %360
    %v362 = vrcp.pop %v361
    %v364 = vlaneseq
    %v365 = vshrl.u32 %v364, 7
    %v366 = vsub.s32 0, %v365
    %v367 = vrot.slane %v362, %v366
    %v368 = vlaneseq
    %v369 = vshrl.u32 %v368, 7
    %v370 = vsub.s32 1, %v369
    %v371 = vrot.slane %v362, %v370
    %v374 = vmul.f32 %v338, %v367
    %v375 = vmul.f32 %v340, %v371
    %377 = vset.pattern.permute.xlu0 0
    %378 = vperm.xlu0 %377, %v374
    %v379 = vpop.permute.xlu0 %378
    %382 = vset.pattern.permute.xlu0 0
    %383 = vperm.xlu0 %382, %v375
    %v384 = vpop.permute.xlu0 %383
    %v386 = vmul.f32 %v379, %v80
    %v387 = vmul.f32 %v384, %v81
    %v388 = vsel %vm94, %v386, 0.0
    %v389 = vrot.slane %v388, 4
    %v390 = vadd.f32 %v388, %v389
    %v391 = vrot.slane %v390, 2
    %v392 = vadd.f32 %v390, %v391
    %v393 = vrot.slane %v392, 1
    %v394 = vadd.f32 %v392, %v393
    %v395 = vsel %vm94, %v387, 0.0
    %v396 = vrot.slane %v395, 4
    %v397 = vadd.f32 %v395, %v396
    %v398 = vrot.slane %v397, 2
    %v399 = vadd.f32 %v397, %v398
    %v400 = vrot.slane %v399, 1
    %v401 = vadd.f32 %v399, %v400
    %v404 = vsel %vm317, %v401, %v394
    %vm406 = vcmask 254976
    %407 = vst.msk [vmem:[#allocation10] sm:$0x3] %vm406, %v404
    %v408 = vlaneseq
    %v409 = vshrl.u32 %v408, 7
    %v410 = vsub.s32 %v308, %v409
    %v411 = vrot.slane %v379, %v410
    %v412 = vlaneseq
    %v413 = vshrl.u32 %v412, 7
    %v414 = vsub.s32 %v308, %v413
    %v415 = vrot.slane %v384, %v414
    %v416 = vsel %vm317, %v415, %v411
    %418 = vst.msk [vmem:[#allocation11] sm:$0x3] %vm320, %v416
    // Predicated region
    $region42: #{tpu_custom_call.1} parent=1 // pred_check
      _
    $region43: #{tpu_custom_call.1} parent=1 // pred_check_branch
      %420 = sbr.rel (0) target = $region45
    $region44: #{tpu_custom_call.1} parent=1 // pred_region
      %s422 = ssub.s32 32, 32
      %423 = vsyncadd [#allocation4], %s422
      %s425 = sshll.u32 [#allocation10], 4
      %s426 = int_to_ptr.vmem [resolvable:$true] %s425
      %428 = dma.vmem_to_hbm [thread:$0]  %s426, 32, %s6, [#allocation4]
    $region45: #{tpu_custom_call.1} parent=1 // pred_fallthru
      _
    // Predicated region
    $region46: #{tpu_custom_call.1} parent=1 // pred_check
      _
    $region47: #{tpu_custom_call.1} parent=1 // pred_check_branch
      %430 = sbr.rel (0) target = $region49
    $region48: #{tpu_custom_call.1} parent=1 // pred_region
      %s432 = ssub.s32 32, 32
      %433 = vsyncadd [#allocation12], %s432
      %s435 = sshll.u32 [#allocation11], 4
      %s436 = int_to_ptr.vmem [resolvable:$true] %s435
      %438 = dma.vmem_to_hbm [thread:$0]  %s436, 32, %s7, [#allocation12]
    $region49: #{tpu_custom_call.1} parent=1 // pred_fallthru
      _
    // Predicated region
    $region50: #{tpu_custom_call.1} parent=1 // pred_check
      _
    $region51: #{tpu_custom_call.1} parent=1 // pred_check_branch
      %440 = sbr.rel (0) target = $region53
    $region52: #{tpu_custom_call.1} parent=1 // pred_region
      %441 = dma.done [#allocation4], 32
    $region53: #{tpu_custom_call.1} parent=1 // pred_fallthru
      _
    // Predicated region
    $region54: #{tpu_custom_call.1} parent=1 // pred_check
      _
    $region55: #{tpu_custom_call.1} parent=1 // pred_check_branch
      %443 = sbr.rel (0) target = $region57
    $region56: #{tpu_custom_call.1} parent=1 // pred_region
      %444 = dma.done [#allocation12], 32
    $region57: #{tpu_custom_call.1} parent=1 // pred_fallthru
      _
    %445 = vsyncpa [#allocation3], 1
    %446 = vsyncpa [#allocation6], 1
    %447 = vsyncpa [#allocation9], 1
    %448 = vsyncpa [#allocation4], 1
    %449 = vsyncpa [#allocation12], 1

</llo_original>
